<compile_context>
chip_gen: v5e
topology: v5e:2x2
jax: 0.10.0
libtpu: 0.0.40
codegen_flags: <defaults>
</compile_context>

<pallas_src>
import functools
from typing import Any, NamedTuple

import jax
import jax.numpy as jnp
from jax.experimental import pallas as pl
from jax.experimental.pallas import tpu as pltpu


# ----------------------------------------------------------------------------
# Kernel
# ----------------------------------------------------------------------------
def _linear_kernel(x_ref, w_ref, b_ref, o_ref):
    """One (i, j, k) step of  out[i, j] = sum_k x[i, k] @ w[k, j] + b[j].

    o_ref is the f32 output block, resident across the K axis, used directly
    as the accumulator (no separate VMEM scratch).
    """
    k = pl.program_id(2)

    @pl.when(k == 0)
    def _init():
        o_ref[...] = jnp.zeros_like(o_ref)

    # MXU matmul, f32 accumulation. w_ref is already [tk, tn] (pre-transposed
    # once at init), so no in-kernel transpose / XLU traffic.
    o_ref[...] += jnp.dot(
        x_ref[...], w_ref[...], preferred_element_type=jnp.float32
    )

    @pl.when(k == pl.num_programs(2) - 1)
    def _finalize():
        # Bias added exactly once per output tile.
        o_ref[...] += b_ref[...]


# ----------------------------------------------------------------------------
# Tiling helpers (pure Python on static shapes)
# ----------------------------------------------------------------------------
def _round_up(x, m):
    return ((x + m - 1) // m) * m


def _pick_tile(dim, unit, max_tile):
    """Largest tile (multiple of `unit`, <= max_tile) that minimizes padding.

    If the dim (rounded to `unit`) fits under max_tile, use it whole (single
    block, zero waste). Otherwise search unit-multiples from max_tile down and
    take the first zero-waste divisor, else the minimal-waste tile.
    """
    padded_min = _round_up(max(dim, 1), unit)
    if padded_min <= max_tile:
        return padded_min
    best_t, best_waste = unit, None
    t = (max_tile // unit) * unit
    while t >= unit:
        waste = _round_up(padded_min, t) - padded_min
        if best_waste is None or waste < best_waste:
            best_t, best_waste = t, waste
            if waste == 0:
                break
        t -= unit
    return best_t


# ----------------------------------------------------------------------------
# One-time parameter preparation (hoisted out of the per-call path)
# ----------------------------------------------------------------------------
class LinearParams(NamedTuple):
    w_p: jax.Array        # [Kp, Np]  W^T, zero-padded, compute dtype
    b_p: jax.Array        # [1,  Np]  bias, zero-padded, f32
    in_features: int
    out_features: int
    tn: int
    tk: int
    compute_dtype: Any


def prepare_linear_params(weight, bias, *, compute_dtype=jnp.float32,
                          tn_max=512, tk_max=None):
    """Transpose + pad nn.Linear parameters ONCE (outside the hot loop).

    weight: [Out, In] (PyTorch layout), bias: [Out].
    """
    Out, In = weight.shape
    if tk_max is None:
        tk_max = 2048 if compute_dtype == jnp.bfloat16 else 1024

    tn = _pick_tile(Out, 128, tn_max)   # lane-dense output / weight columns
    tk = _pick_tile(In, 128, tk_max)    # reduction tile
    Np = _round_up(Out, tn)
    Kp = _round_up(In, tk)

    w_t = weight.T.astype(compute_dtype)                     # [In, Out]
    w_p = jnp.zeros((Kp, Np), compute_dtype).at[:In, :Out].set(w_t)
    b_p = jnp.zeros((1, Np), jnp.float32).at[0, :Out].set(
        bias.astype(jnp.float32))
    return LinearParams(w_p, b_p, In, Out, tn, tk, compute_dtype)


# ----------------------------------------------------------------------------
# Forward
# ----------------------------------------------------------------------------
@functools.partial(
    jax.jit, static_argnames=("out_features", "tn", "tk", "tm", "compute_dtype"))
def lr_forward(x, w_p, b_p, *, out_features, tn, tk, tm=None,
               compute_dtype=jnp.float32):
    """Pallas equivalent of LR.forward: x @ W^T + b, always returning f32.

    x:   [B, In]  (In == true in_features; padded internally to Kp)
    w_p: [Kp, Np] pre-transposed, padded weight (from prepare_linear_params)
    b_p: [1, Np]  padded bias
    """
    B, In = x.shape
    Kp, Np = w_p.shape
    assert In <= Kp and Np % tn == 0 and Kp % tk == 0

    itemsize = 2 if compute_dtype == jnp.bfloat16 else 4
    m_unit = 16 if compute_dtype == jnp.bfloat16 else 8   # sublane packing

    # M tile: whole (rounded) batch if it fits, else largest low-waste tile.
    # Prefer large tm -> fewer M-blocks -> fewer re-streams of the weight.
    if tm is None:
        tm = _pick_tile(B, m_unit, 512)
    Bp = _round_up(B, tm)
    gm, gn = Bp // tm, Np // tn

    # Megacore guard (v7x has 2 TensorCores): keep >= 2 parallel blocks when
    # the M tile can still be split.
    if gm * gn < 2 and tm >= 2 * m_unit:
        tm = _round_up(-(-tm // 2), m_unit)
        Bp = _round_up(B, tm)
        gm = Bp // tm

    grid = (gm, gn, Kp // tk)   # (M, N, K), K innermost

    # Pad / cast the activation (runtime input — cannot be hoisted). Zeros in
    # the padded K columns contribute exactly 0 to the dot.
    if (Bp, Kp) != (B, In) or x.dtype != compute_dtype:
        x_p = jnp.zeros((Bp, Kp), compute_dtype).at[:B, :In].set(
            x.astype(compute_dtype))
    else:
        x_p = x

    out_p = pl.pallas_call(
        _linear_kernel,
        out_shape=jax.ShapeDtypeStruct((Bp, Np), jnp.float32),
        grid_spec=pltpu.PrefetchScalarGridSpec(
            num_scalar_prefetch=0,
            grid=grid,
            in_specs=[
                pl.BlockSpec((tm, tk), lambda i, j, k: (i, k)),   # x tile
                pl.BlockSpec((tk, tn), lambda i, j, k: (k, j)),   # W^T tile
                pl.BlockSpec((1, tn), lambda i, j, k: (0, j)),    # bias tile
            ],
            out_specs=pl.BlockSpec((tm, tn), lambda i, j, k: (i, j)),
        ),
        compiler_params=pltpu.CompilerParams(
            dimension_semantics=("parallel", "parallel", "arbitrary"),
            # Safe on all generations (v5e/v6e: 128 MiB phys, v7x: 64 MiB),
            # relaxes v5e's 16 MiB scoped default for the larger tiles.
            vmem_limit_bytes=32 * 1024 * 1024,
        ),
        cost_estimate=pl.CostEstimate(
            flops=2 * Bp * Kp * Np,
            transcendentals=0,
            bytes_accessed=(itemsize * Bp * Kp            # x (once)
                            + itemsize * Kp * Np * gm     # W streamed per M-block
                            + 4 * Bp * Np + 4 * Np),      # out + bias
        ),
    )(x_p, w_p, b_p)

    return out_p[:B, :out_features]


def lr_apply(params: LinearParams, x):
    assert x.shape[-1] == params.in_features
    return lr_forward(
        x, params.w_p, params.b_p,
        out_features=params.out_features,
        tn=params.tn, tk=params.tk,
        compute_dtype=params.compute_dtype)


# ----------------------------------------------------------------------------
# Self-test
# ----------------------------------------------------------------------------
if __name__ == "__main__":
    key = jax.random.PRNGKey(0)

    # --- Case 1: the module's own example — batch=2, input_size=1, output_size=1.
    input_size, output_size = 1, 1
    kw, kb, key = jax.random.split(key, 3)
    bound = 1.0 / (input_size ** 0.5)
    weight = jax.random.uniform(
        kw, (output_size, input_size), jnp.float32, minval=-bound, maxval=bound)
    bias = jax.random.uniform(
        kb, (output_size,), jnp.float32, minval=-bound, maxval=bound)
    x = jnp.array([[1.0], [1.0]], dtype=jnp.float32)  # [2, 1]

    params = prepare_linear_params(weight, bias)      # hoisted: done once
    pred = lr_apply(params, x)
    jax.block_until_ready(pred)
    ref = x @ weight.T + bias
    assert pred.shape == (2, output_size), pred.shape
    assert jnp.allclose(pred, ref, atol=1e-6), (pred, ref)

    # --- Case 2: exercises multi-block (M, K) grid, K accumulation, finalize,
    #     the megacore M-split, and exact-divisor tile picks (Out=384 -> tn=384).
    B2, In2, Out2 = 64, 2304, 384
    kx, kw2, kb2, key = jax.random.split(key, 4)
    x2 = jax.random.normal(kx, (B2, In2), jnp.float32)
    bound2 = 1.0 / (In2 ** 0.5)
    w2 = jax.random.uniform(kw2, (Out2, In2), jnp.float32,
                            minval=-bound2, maxval=bound2)
    b2 = jax.random.uniform(kb2, (Out2,), jnp.float32,
                            minval=-bound2, maxval=bound2)
    ref2 = x2 @ w2.T + b2

    params2 = prepare_linear_params(w2, b2)           # f32 path
    pred2 = lr_apply(params2, x2)
    jax.block_until_ready(pred2)
    assert pred2.shape == (B2, Out2), pred2.shape
    assert jnp.allclose(pred2, ref2, rtol=1e-4, atol=1e-4), float(
        jnp.max(jnp.abs(pred2 - ref2)))

    # --- Case 3: bf16 MXU-feed path (f32 accumulation) — explicit accuracy
    #     trade-off, compared against the f32 reference with loose tolerance.
    params3 = prepare_linear_params(w2, b2, compute_dtype=jnp.bfloat16)
    pred3 = lr_apply(params3, x2)
    jax.block_until_ready(pred3)
    assert pred3.shape == (B2, Out2), pred3.shape
    assert jnp.allclose(pred3, ref2, rtol=3e-2, atol=3e-2), float(
        jnp.max(jnp.abs(pred3 - ref2)))

    print("KERNEL_OK")
</pallas_src>

<mosaic_0001>
module attributes {stable_mosaic.version = 11 : i64} {
  func.func @_linear_kernel(%arg0: i32, %arg1: i32, %arg2: i32, %arg3: memref<8x128xf32, #tpu.memory_space<vmem>>, %arg4: memref<128x128xf32, #tpu.memory_space<vmem>>, %arg5: memref<1x128xf32, #tpu.memory_space<vmem>>, %arg6: memref<8x128xf32, #tpu.memory_space<vmem>>) attributes {dimension_semantics = [#tpu.dimension_semantics<parallel>, #tpu.dimension_semantics<parallel>, #tpu.dimension_semantics<arbitrary>], iteration_bounds = array<i64: 1, 1, 1>, scalar_prefetch = 0 : i64, scratch_operands = 0 : i64, tpu.core_type = #tpu.core_type<tc>, window_params = [{transform_indices = @transform_0, window_bounds = array<i64: 8, 128>}, {transform_indices = @transform_1, window_bounds = array<i64: 128, 128>}, {transform_indices = @transform_2, window_bounds = array<i64: 1, 128>}, {transform_indices = @transform_3, window_bounds = array<i64: 8, 128>}]} {
    %c0_i32 = arith.constant 0 : i32
    %0 = arith.cmpi eq, %arg2, %c0_i32 : i32
    %1 = arith.extui %0 : i1 to i32
    %c0_i32_0 = arith.constant 0 : i32
    %2 = arith.cmpi ne, %1, %c0_i32_0 : i32
    scf.if %2 {
      %cst_10 = arith.constant 0.000000e+00 : f32
      %12 = vector.broadcast %cst_10 : f32 to vector<8x128xf32>
      %c0_11 = arith.constant 0 : index
      %c0_12 = arith.constant 0 : index
      %13 = vector.load %arg6[%c0_11, %c0_12] : memref<8x128xf32, #tpu.memory_space<vmem>>, vector<8x128xf32>
      tpu.vector_store %arg6[%c0_11, %c0_12], %12 {strides = array<i32>} : memref<8x128xf32, #tpu.memory_space<vmem>>, vector<8x128xf32>,
    } else {
    }
    %c0 = arith.constant 0 : index
    %c0_1 = arith.constant 0 : index
    %3 = vector.load %arg6[%c0, %c0_1] : memref<8x128xf32, #tpu.memory_space<vmem>>, vector<8x128xf32>
    %c0_2 = arith.constant 0 : index
    %c0_3 = arith.constant 0 : index
    %4 = vector.load %arg3[%c0_2, %c0_3] : memref<8x128xf32, #tpu.memory_space<vmem>>, vector<8x128xf32>
    %c0_4 = arith.constant 0 : index
    %c0_5 = arith.constant 0 : index
    %5 = vector.load %arg4[%c0_4, %c0_5] : memref<128x128xf32, #tpu.memory_space<vmem>>, vector<128x128xf32>
    %cst = arith.constant dense<0.000000e+00> : vector<8x128xf32>
    %6 = tpu.matmul %4, %5, %cst {dimension_numbers = #tpu.dot_dimension_numbers<[1], [0], [0], [1], [0, 0, 1, 1], [], []>} : vector<8x128xf32>, vector<128x128xf32>, vector<8x128xf32> -> vector<8x128xf32>
    %7 = arith.addf %3, %6 : vector<8x128xf32>
    %c0_6 = arith.constant 0 : index
    %c0_7 = arith.constant 0 : index
    %8 = vector.load %arg6[%c0_6, %c0_7] : memref<8x128xf32, #tpu.memory_space<vmem>>, vector<8x128xf32>
    tpu.vector_store %arg6[%c0_6, %c0_7], %7 {strides = array<i32>} : memref<8x128xf32, #tpu.memory_space<vmem>>, vector<8x128xf32>,
    %c0_i32_8 = arith.constant 0 : i32
    %9 = arith.cmpi eq, %arg2, %c0_i32_8 : i32
    %10 = arith.extui %9 : i1 to i32
    %c0_i32_9 = arith.constant 0 : i32
    %11 = arith.cmpi ne, %10, %c0_i32_9 : i32
    scf.if %11 {
      %c0_10 = arith.constant 0 : index
      %c0_11 = arith.constant 0 : index
      %12 = vector.load %arg6[%c0_10, %c0_11] : memref<8x128xf32, #tpu.memory_space<vmem>>, vector<8x128xf32>
      %c0_12 = arith.constant 0 : index
      %c0_13 = arith.constant 0 : index
      %13 = vector.load %arg5[%c0_12, %c0_13] : memref<1x128xf32, #tpu.memory_space<vmem>>, vector<1x128xf32>
      %14 = vector.broadcast %13 : vector<1x128xf32> to vector<8x128xf32>
      %15 = arith.addf %12, %14 : vector<8x128xf32>
      %c0_14 = arith.constant 0 : index
      %c0_15 = arith.constant 0 : index
      %16 = vector.load %arg6[%c0_14, %c0_15] : memref<8x128xf32, #tpu.memory_space<vmem>>, vector<8x128xf32>
      tpu.vector_store %arg6[%c0_14, %c0_15], %15 {strides = array<i32>} : memref<8x128xf32, #tpu.memory_space<vmem>>, vector<8x128xf32>,
    } else {
    }
    return
  }
  func.func @transform_0(%arg0: i32, %arg1: i32, %arg2: i32) -> (i32, i32) {
    %c0_i32 = arith.constant 0 : i32
    return %arg0, %arg2 : i32, i32
  }
  func.func @transform_1(%arg0: i32, %arg1: i32, %arg2: i32) -> (i32, i32) {
    %c0_i32 = arith.constant 0 : i32
    return %arg2, %arg1 : i32, i32
  }
  func.func @transform_2(%arg0: i32, %arg1: i32, %arg2: i32) -> (i32, i32) {
    %c0_i32 = arith.constant 0 : i32
    %c0_i32_0 = arith.constant 0 : i32
    return %c0_i32, %arg1 : i32, i32
  }
  func.func @transform_3(%arg0: i32, %arg1: i32, %arg2: i32) -> (i32, i32) {
    %c0_i32 = arith.constant 0 : i32
    return %arg0, %arg1 : i32, i32
  }
}

</mosaic_0001>

<llo_original>
// kernel: lr_forward.1
$region0: #{lr_forward.1}
  #allocation0 [shape = 'u32[]', space=smem, size = 0x4, offset = 0x4, fixed_abs, tag = 'smem constant byte address 0x4 - core index']
  #allocation1 [shape = 'u32[72,128]{1,0:T(1,128)}', space=vmem, size = 0x9000, scoped, tag = 'internal scratch']
  %s0 = inlined_call_operand.vmem [shape: f32[8,128], index: 0, kind: input, shape index: {}]
  %s1 = inlined_call_operand.hbm [shape: f32[128,128], index: 1, kind: input, shape index: {}]
  %s2 = inlined_call_operand.vmem [shape: f32[1,128], index: 2, kind: input, shape index: {}]
  %s3 = inlined_call_operand.vmem [shape: f32[8,128], index: 3, kind: output, shape index: {}]
  %s4 = sld [smem:[#allocation0]]
  $region34: #{lr_forward.1} parent=0
    _
  %s6 = ssub.s32 1, %s4
  %s7 = scalar_select 0, %s6, %s4
  $region1: #{lr_forward.1} parent=0
    #allocation2 [shape = 'u8[65536]{0}', space=vmem, size = 0x10000, scoped, tag = 'input window, operand 1, single buffered']
    #allocation3 [shape = 's32[1]{0}', space=sflag, size = 0x4, scoped, tag = 'scoped memory for lr_forward.1']
    %8 = vsyncpa [#allocation3], 0
    // Predicated region
    $region2: #{lr_forward.1} parent=1 // pred_check
      _
    $region3: #{lr_forward.1} parent=1 // pred_check_branch
      %10 = sbr.rel (0) target = $region5
    $region4: #{lr_forward.1} parent=1 // pred_region
      _
    $region5: #{lr_forward.1} parent=1 // pred_fallthru
      _
    // Predicated region
    $region6: #{lr_forward.1} parent=1 // pred_check
      _
    $region7: #{lr_forward.1} parent=1 // pred_check_branch
      %12 = sbr.rel (0) target = $region9
    $region8: #{lr_forward.1} parent=1 // pred_region
      %14 = vsyncadd [#allocation3], 0
      %s15 = sshll.u32 %s1, 4
      %s16 = int_to_ptr.hbm [resolvable:$true] %s15
      %s17 = sshll.u32 [#allocation2], 4
      %s18 = int_to_ptr.vmem [resolvable:$true] %s17
      %23 = dma.hbm_to_vmem [thread:$0]  %s16, 2048, %s18, [#allocation3], 128, 128, 8
    $region9: #{lr_forward.1} parent=1 // pred_fallthru
      _
    // Predicated region
    $region10: #{lr_forward.1} parent=1 // pred_check
      _
    $region11: #{lr_forward.1} parent=1 // pred_check_branch
      %25 = sbr.rel (0) target = $region13
    $region12: #{lr_forward.1} parent=1 // pred_region
      _
    $region13: #{lr_forward.1} parent=1 // pred_fallthru
      _
    // Predicated region
    $region14: #{lr_forward.1} parent=1 // pred_check
      _
    $region15: #{lr_forward.1} parent=1 // pred_check_branch
      %27 = sbr.rel (0) target = $region17
    $region16: #{lr_forward.1} parent=1 // pred_region
      %29 = dma.done [#allocation3], 2048
    $region17: #{lr_forward.1} parent=1 // pred_fallthru
      _
    %p30 = scmp.eq.s32.totalorder 0, 0
    // Predicated region
    $region18: #{lr_forward.1} parent=1 // pred_check
      %p31 = pneg %p30
    $region19: #{lr_forward.1} parent=1 // pred_check_branch
      %33 = sbr.rel (%p31) target = $region21
    $region20: #{lr_forward.1} parent=1 // pred_region
      %34 = vst [vmem:[%s3] sm:$0xff] 0.0
    $region21: #{lr_forward.1} parent=1 // pred_fallthru
      _
    %v35 = vld [vmem:[%s3] sm:$0xff]
    %v36 = vld [vmem:[%s0] sm:$0xff]
    %v37 = vld [vmem:[#allocation2] sm:$0xff]
    %v38 = vld [vmem:[#allocation2 + $0x8] sm:$0xff]
    %v39 = vld [vmem:[#allocation2 + $0x10] sm:$0xff]
    %v40 = vld [vmem:[#allocation2 + $0x18] sm:$0xff]
    %v41 = vld [vmem:[#allocation2 + $0x20] sm:$0xff]
    %v42 = vld [vmem:[#allocation2 + $0x28] sm:$0xff]
    %v43 = vld [vmem:[#allocation2 + $0x30] sm:$0xff]
    %v44 = vld [vmem:[#allocation2 + $0x38] sm:$0xff]
    %v45 = vld [vmem:[#allocation2 + $0x40] sm:$0xff]
    %v46 = vld [vmem:[#allocation2 + $0x48] sm:$0xff]
    %v47 = vld [vmem:[#allocation2 + $0x50] sm:$0xff]
    %v48 = vld [vmem:[#allocation2 + $0x58] sm:$0xff]
    %v49 = vld [vmem:[#allocation2 + $0x60] sm:$0xff]
    %v50 = vld [vmem:[#allocation2 + $0x68] sm:$0xff]
    %v51 = vld [vmem:[#allocation2 + $0x70] sm:$0xff]
    %v52 = vld [vmem:[#allocation2 + $0x78] sm:$0xff]
    %53 = vmatpush.msra.mxu0 %v52
    %54 = vmatpush.msra.mxu0 %v51
    %55 = vmatpush.msra.mxu0 %v50
    %56 = vmatpush.msra.mxu0 %v49
    %57 = vmatpush.msra.mxu0 %v48
    %58 = vmatpush.msra.mxu0 %v47
    %59 = vmatpush.msra.mxu0 %v46
    %60 = vmatpush.msra.mxu0 %v45
    %61 = vmatpush.msra.mxu0 %v44
    %62 = vmatpush.msra.mxu0 %v43
    %63 = vmatpush.msra.mxu0 %v42
    %64 = vmatpush.msra.mxu0 %v41
    %65 = vmatpush.msra.mxu0 %v40
    %66 = vmatpush.msra.mxu0 %v39
    %67 = vmatpush.msra.mxu0 %v38
    %68 = vmatpush.msra.mxu0 %v37
    %69 = vmatmul.f32.gmra.mxu0 %v36
    %v70 = vpop.f32.mrf.mxu0
    %v71 = vadd.f32 0.0, %v70
    %72 = vdwg.mxu0
    %v73 = vadd.f32 %v35, %v71
    %74 = vst [vmem:[%s3] sm:$0xff] %v73
    // Predicated region
    $region22: #{lr_forward.1} parent=1 // pred_check
      %p75 = pneg %p30
    $region23: #{lr_forward.1} parent=1 // pred_check_branch
      %77 = sbr.rel (%p75) target = $region25
    $region24: #{lr_forward.1} parent=1 // pred_region
      %v78 = vld [vmem:[%s3] sm:$0xff]
      %v79 = vld [vmem:[%s2] sm:$0x1]
      %v81 = vperm.slane %v79, 0
      %v83 = vadd.f32 %v78, %v81
      %84 = vst [vmem:[%s3] sm:$0xff] %v83
    $region25: #{lr_forward.1} parent=1 // pred_fallthru
      _
    // Predicated region
    $region26: #{lr_forward.1} parent=1 // pred_check
      _
    $region27: #{lr_forward.1} parent=1 // pred_check_branch
      %86 = sbr.rel (0) target = $region29
    $region28: #{lr_forward.1} parent=1 // pred_region
      _
    $region29: #{lr_forward.1} parent=1 // pred_fallthru
      _
    // Predicated region
    $region30: #{lr_forward.1} parent=1 // pred_check
      _
    $region31: #{lr_forward.1} parent=1 // pred_check_branch
      %88 = sbr.rel (0) target = $region33
    $region32: #{lr_forward.1} parent=1 // pred_region
      _
    $region33: #{lr_forward.1} parent=1 // pred_fallthru
      _
    %89 = vsyncpa [#allocation3], 1

</llo_original>
